<compile_context>
chip_gen: v7x
topology: tpu7x:2x2x1
jax: 0.10.0
libtpu: 0.0.40
codegen_flags: <defaults>
</compile_context>

<pallas_src>
import jax
import jax.numpy as jnp
from jax.experimental import pallas as pl
from jax.experimental.pallas import tpu as pltpu


def _maskiou_post_kernel(miou_ref, labels_ref, scores_ref, out_ref):
    # miou_ref:   (C, bn)  model dtype (f32 or bf16)
    # labels_ref: (1, bn)  int32
    # scores_ref: (1, bn)  f32/bf16
    # out_ref:    (1, bn)  f32
    miou = miou_ref[...].astype(jnp.float32)           # cast after load (VPU)
    labels = labels_ref[...]                            # (1, bn)
    scores = scores_ref[...].astype(jnp.float32)        # (1, bn)

    # Class index along the sublane axis; compare against the per-lane label
    # to build a one-hot mask, then reduce over the small C (sublane) axis.
    cls = jax.lax.broadcasted_iota(jnp.int32, miou.shape, dimension=0)  # (C, bn)
    gathered = jnp.sum(jnp.where(cls == labels, miou, 0.0),
                       axis=0, keepdims=True)                           # (1, bn)

    out_ref[...] = gathered * scores                    # lane-dense, unmasked store


def maskiou_mask_scores(pred_maskiou, labels, scores, block_n=2048):
    """mask_scores[i] = scores[i] * pred_maskiou[i, labels[i]]  -> shape [N], f32."""
    n, c = pred_maskiou.shape
    if n == 0:
        return jnp.zeros((0,), jnp.float32)

    # Lane-axis block: multiple of 128, shrunk for small N, capped to amortize
    # per-step overhead.  Even at C=81, block_n=2048 is ~0.7 MB/buffer, which
    # double-buffered fits easily in v7x's 64 MiB VMEM.
    block_n = max(128, min(int(block_n), pl.next_power_of_2(n)))
    n_pad = pl.cdiv(n, block_n) * block_n

    # Layout plumbing: class-major (C, N) so N lies on lanes.  No dtype upcast.
    miou_t = jnp.transpose(pred_maskiou)                        # (C, N)
    labels_r = labels.astype(jnp.int32).reshape(1, n)
    scores_r = scores.reshape(1, n)

    pad = n_pad - n
    if pad:
        miou_t = jnp.pad(miou_t, ((0, 0), (0, pad)))
        # -1 never matches the class iota -> padded lanes gather 0.
        labels_r = jnp.pad(labels_r, ((0, 0), (0, pad)), constant_values=-1)
        scores_r = jnp.pad(scores_r, ((0, 0), (0, pad)))

    grid = (n_pad // block_n,)
    out = pl.pallas_call(
        _maskiou_post_kernel,
        out_shape=jax.ShapeDtypeStruct((1, n_pad), jnp.float32),
        grid_spec=pltpu.PrefetchScalarGridSpec(
            num_scalar_prefetch=0,
            grid=grid,
            in_specs=[
                pl.BlockSpec((c, block_n), lambda i: (0, i)),
                pl.BlockSpec((1, block_n), lambda i: (0, i)),
                pl.BlockSpec((1, block_n), lambda i: (0, i)),
            ],
            out_specs=pl.BlockSpec((1, block_n), lambda i: (0, i)),
        ),
        compiler_params=pltpu.CompilerParams(
            dimension_semantics=("parallel",),    # shards across v7x's 2 TCs
        ),
    )(miou_t, labels_r, scores_r)
    return out[0, :n]


def maskiou_post_processor(boxes, pred_maskiou, labels):
    """JAX analogue of MaskIoUPostProcessor.forward.

    `boxes` is a list of dicts with keys 'bbox', 'size', 'scores', 'mask'
    (mirroring BoxList fields).  Returns a list of dicts with an added
    'mask_scores' field.  Like the PyTorch original, the single maskiou tensor
    is zipped against `boxes`, so exactly one box (the first) is processed —
    one fused kernel launch total, no per-box dispatch.
    """
    # TODO(synk): BoxList construction / .cpu().numpy() host transfers have no
    # Pallas equivalent; represented as plain-dict field copies here.
    results = []
    maskiou_items = [(pred_maskiou, labels)]      # mirrors `maskious = [maskious]`
    for (miou, lbl), box in zip(maskiou_items, boxes):
        bbox_scores = box["scores"]
        mask_scores = maskiou_mask_scores(miou, lbl, bbox_scores)
        out_box = dict(box)                        # copy all fields
        out_box["mask_scores"] = mask_scores       # added field
        out_box["mask"] = box["mask"]              # prob passthrough
        results.append(out_box)
    return results


if __name__ == "__main__":
    key = jax.random.PRNGKey(0)
    k1, k2, k3, k4, k5 = jax.random.split(key, 5)

    N = 8          # number of masks / detections
    C = 16         # number of classes
    M = 14         # mask spatial size (prob passthrough field)

    pred_maskiou = jax.random.uniform(k1, (N, C), dtype=jnp.float32)
    labels = jax.random.randint(k2, (N,), 0, C, dtype=jnp.int32)
    scores = jax.random.uniform(k3, (N,), dtype=jnp.float32)
    bbox = jax.random.uniform(k4, (N, 4), dtype=jnp.float32) * 100.0
    mask_prob = jax.random.uniform(k5, (N, 1, M, M), dtype=jnp.float32)

    boxes = [{
        "bbox": bbox,
        "size": (128, 128),
        "scores": scores,
        "mask": mask_prob,
    }]

    results = maskiou_post_processor(boxes, pred_maskiou, labels)
    mask_scores = jax.block_until_ready(results[0]["mask_scores"])

    # Reference check (plain JAX gather) to validate kernel semantics.
    ref = scores * pred_maskiou[jnp.arange(N), labels]
    assert mask_scores.shape == (N,), mask_scores.shape
    assert jnp.allclose(mask_scores, ref, atol=1e-6), (mask_scores, ref)

    print("KERNEL_OK")
</pallas_src>

<mosaic_0001>
module attributes {stable_mosaic.version = 11 : i64} {
  func.func @_maskiou_post_kernel(%arg0: i32, %arg1: memref<16x128xf32, #tpu.memory_space<vmem>>, %arg2: memref<1x128xi32, #tpu.memory_space<vmem>>, %arg3: memref<1x128xf32, #tpu.memory_space<vmem>>, %arg4: memref<1x128xf32, #tpu.memory_space<vmem>>) attributes {dimension_semantics = [#tpu.dimension_semantics<parallel>], iteration_bounds = array<i64: 1>, scalar_prefetch = 0 : i64, scratch_operands = 0 : i64, tpu.core_type = #tpu.core_type<tc>, window_params = [{transform_indices = @transform_0, window_bounds = array<i64: 16, 128>}, {transform_indices = @transform_1, window_bounds = array<i64: 1, 128>}, {transform_indices = @transform_2, window_bounds = array<i64: 1, 128>}, {transform_indices = @transform_3, window_bounds = array<i64: 1, 128>}]} {
    %c0 = arith.constant 0 : index
    %c0_0 = arith.constant 0 : index
    %0 = vector.load %arg1[%c0, %c0_0] : memref<16x128xf32, #tpu.memory_space<vmem>>, vector<16x128xf32>
    %c0_1 = arith.constant 0 : index
    %c0_2 = arith.constant 0 : index
    %1 = vector.load %arg2[%c0_1, %c0_2] : memref<1x128xi32, #tpu.memory_space<vmem>>, vector<1x128xi32>
    %c0_3 = arith.constant 0 : index
    %c0_4 = arith.constant 0 : index
    %2 = vector.load %arg3[%c0_3, %c0_4] : memref<1x128xf32, #tpu.memory_space<vmem>>, vector<1x128xf32>
    %3 = tpu.iota {dimensions = array<i32: 0>} : vector<16x128xi32>
    %4 = vector.broadcast %1 : vector<1x128xi32> to vector<16x128xi32>
    %5 = arith.cmpi eq, %3, %4 : vector<16x128xi32>
    %cst = arith.constant 0.000000e+00 : f32
    %6 = vector.broadcast %cst : f32 to vector<16x128xf32>
    %7 = arith.select %5, %0, %6 : vector<16x128xi1>, vector<16x128xf32>
    %cst_5 = arith.constant dense<0.000000e+00> : vector<128xf32>
    %8 = vector.multi_reduction <add>, %7, %cst_5 [0] : vector<16x128xf32> to vector<128xf32>
    %9 = vector.shape_cast %8 : vector<128xf32> to vector<1x128xf32>
    %10 = arith.mulf %9, %2 : vector<1x128xf32>
    %c0_6 = arith.constant 0 : index
    %c0_7 = arith.constant 0 : index
    %11 = vector.load %arg4[%c0_6, %c0_7] : memref<1x128xf32, #tpu.memory_space<vmem>>, vector<1x128xf32>
    tpu.vector_store %arg4[%c0_6, %c0_7], %10 {strides = array<i32>} : memref<1x128xf32, #tpu.memory_space<vmem>>, vector<1x128xf32>,
    return
  }
  func.func @transform_0(%arg0: i32) -> (i32, i32) {
    %c0_i32 = arith.constant 0 : i32
    %c0_i32_0 = arith.constant 0 : i32
    return %c0_i32, %arg0 : i32, i32
  }
  func.func @transform_1(%arg0: i32) -> (i32, i32) {
    %c0_i32 = arith.constant 0 : i32
    %c0_i32_0 = arith.constant 0 : i32
    return %c0_i32, %arg0 : i32, i32
  }
  func.func @transform_2(%arg0: i32) -> (i32, i32) {
    %c0_i32 = arith.constant 0 : i32
    %c0_i32_0 = arith.constant 0 : i32
    return %c0_i32, %arg0 : i32, i32
  }
  func.func @transform_3(%arg0: i32) -> (i32, i32) {
    %c0_i32 = arith.constant 0 : i32
    %c0_i32_0 = arith.constant 0 : i32
    return %c0_i32, %arg0 : i32, i32
  }
}

</mosaic_0001>

<llo_original>
// kernel: tpu_custom_call.1
$region0: #{tpu_custom_call.1}
  #allocation0 [shape = 'u32[]', space=smem, size = 0x4, offset = 0x4, fixed_abs, tag = 'smem constant byte address 0x4 - core index']
  #allocation1 [shape = 'u32[144,128]{1,0:T(1,128)}', space=vmem, size = 0x12000, scoped, tag = 'internal scratch']
  %s0 = inlined_call_operand.hbm [shape: f32[16,128], index: 0, kind: input, shape index: {}]
  %s1 = inlined_call_operand.vmem [shape: s32[1,128], index: 1, kind: input, shape index: {}]
  %s2 = inlined_call_operand.vmem [shape: f32[1,128], index: 2, kind: input, shape index: {}]
  %s3 = inlined_call_operand.hbm [shape: f32[1,128], index: 3, kind: output, shape index: {}]
  %s4 = sld [smem:[#allocation0]]
  $region26: #{tpu_custom_call.1} parent=0
    _
  %s6 = ssub.s32 1, %s4
  %s7 = scalar_select 0, %s6, %s4
  $region1: #{tpu_custom_call.1} parent=0
    #allocation2 [shape = 'u8[8192]{0}', space=vmem, size = 0x2000, scoped, tag = 'input window, operand 0, single buffered']
    #allocation3 [shape = 's32[1]{0}', space=sflag, size = 0x4, scoped, tag = 'scoped memory for tpu_custom_call.1']
    #allocation4 [shape = 's32[1]{0}', space=sflag, size = 0x4, scoped, tag = 'scoped memory for tpu_custom_call.1']
    #allocation5 [shape = 'u8[512]{0}', space=vmem, size = 0x400, scoped, tag = 'output window, operand 0, single buffered']
    %8 = vsyncpa [#allocation3], 0
    %9 = vsyncpa [#allocation4], 0
    // Predicated region
    $region2: #{tpu_custom_call.1} parent=1 // pred_check
      _
    $region3: #{tpu_custom_call.1} parent=1 // pred_check_branch
      %11 = sbr.rel (0) target = $region5
    $region4: #{tpu_custom_call.1} parent=1 // pred_region
      %s13 = ssub.s32 256, 256
      %14 = vsyncadd [#allocation3], %s13
      %s15 = sshll.u32 [#allocation2], 4
      %s16 = int_to_ptr.vmem [resolvable:$true] %s15
      %21 = dma.hbm_to_vmem [thread:$0]  %s0, 256, %s16, [#allocation3], 128, 128, 8
    $region5: #{tpu_custom_call.1} parent=1 // pred_fallthru
      _
    // Predicated region
    $region6: #{tpu_custom_call.1} parent=1 // pred_check
      _
    $region7: #{tpu_custom_call.1} parent=1 // pred_check_branch
      %23 = sbr.rel (0) target = $region9
    $region8: #{tpu_custom_call.1} parent=1 // pred_region
      _
    $region9: #{tpu_custom_call.1} parent=1 // pred_fallthru
      _
    // Predicated region
    $region10: #{tpu_custom_call.1} parent=1 // pred_check
      _
    $region11: #{tpu_custom_call.1} parent=1 // pred_check_branch
      %25 = sbr.rel (0) target = $region13
    $region12: #{tpu_custom_call.1} parent=1 // pred_region
      _
    $region13: #{tpu_custom_call.1} parent=1 // pred_fallthru
      _
    // Predicated region
    $region14: #{tpu_custom_call.1} parent=1 // pred_check
      _
    $region15: #{tpu_custom_call.1} parent=1 // pred_check_branch
      %27 = sbr.rel (0) target = $region17
    $region16: #{tpu_custom_call.1} parent=1 // pred_region
      %28 = dma.done [#allocation3], 256
    $region17: #{tpu_custom_call.1} parent=1 // pred_fallthru
      _
    %v29 = vld [vmem:[#allocation2] sm:$0xff]
    %v30 = vld [vmem:[#allocation2 + $0x8] sm:$0xff]
    %v31 = vld [vmem:[%s1] sm:$0x1]
    %v32 = vld [vmem:[%s2] sm:$0x1]
    %v33 = vlaneseq
    %v34 = vshrl.u32 %v33, 7
    %v35 = vadd.s32 %v34, 8
    %v36 = vlaneseq
    %v37 = vshrl.u32 %v36, 7
    %v38 = vsub.s32 0, %v37
    %v39 = vrot.slane %v31, %v38
    %vm40 = vcmp.eq.s32.totalorder %v34, %v39
    %vm41 = vcmp.eq.s32.totalorder %v35, %v39
    %v42 = vsel %vm40, %v29, 0.0
    %v43 = vsel %vm41, %v30, 0.0
    %v44 = vadd.f32 %v42, %v43
    %v45 = vrot.slane %v44, 4
    %v46 = vadd.f32 %v44, %v45
    %v47 = vrot.slane %v46, 2
    %v48 = vadd.f32 %v46, %v47
    %v49 = vrot.slane %v48, 1
    %v50 = vadd.f32 %v48, %v49
    %v51 = vmul.f32 %v50, %v32
    %52 = vst [vmem:[#allocation5] sm:$0x1] %v51
    // Predicated region
    $region18: #{tpu_custom_call.1} parent=1 // pred_check
      _
    $region19: #{tpu_custom_call.1} parent=1 // pred_check_branch
      %54 = sbr.rel (0) target = $region21
    $region20: #{tpu_custom_call.1} parent=1 // pred_region
      %s56 = ssub.s32 16, 16
      %57 = vsyncadd [#allocation4], %s56
      %s59 = sshll.u32 [#allocation5], 4
      %s60 = int_to_ptr.vmem [resolvable:$true] %s59
      %62 = dma.vmem_to_hbm [thread:$0]  %s60, 16, %s3, [#allocation4]
    $region21: #{tpu_custom_call.1} parent=1 // pred_fallthru
      _
    // Predicated region
    $region22: #{tpu_custom_call.1} parent=1 // pred_check
      _
    $region23: #{tpu_custom_call.1} parent=1 // pred_check_branch
      %64 = sbr.rel (0) target = $region25
    $region24: #{tpu_custom_call.1} parent=1 // pred_region
      %65 = dma.done [#allocation4], 16
    $region25: #{tpu_custom_call.1} parent=1 // pred_fallthru
      _
    %66 = vsyncpa [#allocation3], 1
    %67 = vsyncpa [#allocation4], 1

</llo_original>
